<compile_context>
chip_gen: v6e
topology: v6e:2x2x1
jax: 0.10.0
libtpu: 0.0.40
codegen_flags: <defaults>
</compile_context>

<pallas_src>
from functools import partial

import jax
import jax.numpy as jnp
from jax.experimental import pallas as pl
from jax.experimental.pallas import tpu as pltpu

EPS = 1e-5  # nn.BatchNorm2d default


def _round_up(x, m):
    return (x + m - 1) // m * m


def _conv_emb_kernel(x_ref, w_ref, gamma_ref, beta_ref, out_ref,
                     sum_ref, sumsq_ref, scale_ref, shift_ref,
                     *, n_valid_rows, eps):
    # x_ref:   (tile_m, Cin)       bf16
    # w_ref:   (Cin, Cout_pad)     bf16
    # gamma/beta: (1, Cout_pad)    f32
    # out_ref: (tile_m, Cout_pad)  f32
    phase = pl.program_id(0)
    tile = pl.program_id(1)

    # 1x1 conv == channel matmul on the MXU (bf16 in, f32 accumulate).
    # NOTE: the conv bias is intentionally omitted — training-mode BatchNorm
    # subtracts the per-channel mean, which cancels a constant bias exactly.
    conv = jnp.dot(x_ref[...], w_ref[...], preferred_element_type=jnp.float32)

    @pl.when(jnp.logical_and(phase == 0, tile == 0))
    def _init_stats():
        sum_ref[...] = jnp.zeros_like(sum_ref)
        sumsq_ref[...] = jnp.zeros_like(sumsq_ref)

    @pl.when(phase == 0)
    def _accumulate_stats():
        # Zero-padded rows contribute exactly 0 to both sums, so dividing by
        # the true row count (n_valid_rows) later gives correct statistics.
        sum_ref[...] += jnp.sum(conv, axis=0, keepdims=True)
        sumsq_ref[...] += jnp.sum(conv * conv, axis=0, keepdims=True)

    @pl.when(jnp.logical_and(phase == 1, tile == 0))
    def _finalize_stats():
        inv_n = 1.0 / float(n_valid_rows)
        mean = sum_ref[...] * inv_n
        var = sumsq_ref[...] * inv_n - mean * mean  # biased (training-mode) var
        scale = gamma_ref[...] * jax.lax.rsqrt(var + eps)
        scale_ref[...] = scale
        shift_ref[...] = beta_ref[...] - mean * scale

    @pl.when(phase == 1)
    def _normalize_relu_store():
        y = conv * scale_ref[...] + shift_ref[...]
        out_ref[...] = jnp.maximum(y, 0.0).astype(out_ref.dtype)


def conv_emb_forward(x_nchw, w_oihw, conv_bias, gamma, beta, *, eps=EPS, tile_m=256):
    """Equivalent of Conv_emb.forward(x) with x in NCHW (training-mode BN stats)."""
    del conv_bias  # mathematically a no-op under training-mode BatchNorm (see kernel note)

    N, Cin, H, W = x_nchw.shape
    Cout = w_oihw.shape[0]
    M = N * H * W

    cout_pad = _round_up(Cout, 128)       # lane-dense output / weight columns
    tile_m = _round_up(max(16, tile_m), 16)
    m_pad = _round_up(M, tile_m)
    n_tiles = m_pad // tile_m

    # ---- glue: layout + padding in plain JAX ----
    x_rows = jnp.transpose(x_nchw, (0, 2, 3, 1)).reshape(M, Cin)
    x_rows = jnp.pad(x_rows, ((0, m_pad - M), (0, 0))).astype(jnp.bfloat16)

    w2d = w_oihw.reshape(Cout, Cin).astype(jnp.float32)          # (Cout, Cin)
    w_mat = jnp.zeros((Cin, cout_pad), jnp.float32).at[:, :Cout].set(w2d.T)
    w_mat = w_mat.astype(jnp.bfloat16)

    gamma_p = jnp.zeros((1, cout_pad), jnp.float32).at[0, :Cout].set(
        gamma.astype(jnp.float32))
    beta_p = jnp.zeros((1, cout_pad), jnp.float32).at[0, :Cout].set(
        beta.astype(jnp.float32))

    kernel = partial(_conv_emb_kernel, n_valid_rows=M, eps=eps)

    out = pl.pallas_call(
        kernel,
        out_shape=jax.ShapeDtypeStruct((m_pad, cout_pad), jnp.float32),
        grid_spec=pltpu.PrefetchScalarGridSpec(
            num_scalar_prefetch=0,
            grid=(2, n_tiles),  # (phase, M-tile); phase 0 = stats, phase 1 = normalize
            in_specs=[
                pl.BlockSpec((tile_m, Cin), lambda p, i: (i, 0)),
                pl.BlockSpec((Cin, cout_pad), lambda p, i: (0, 0)),
                pl.BlockSpec((1, cout_pad), lambda p, i: (0, 0)),
                pl.BlockSpec((1, cout_pad), lambda p, i: (0, 0)),
            ],
            # During phase 0 (p == 0) every step maps to output block 0 and the
            # kernel never writes it, so no garbage/extra HBM writeback happens;
            # phase 1 writes each block exactly once.
            out_specs=pl.BlockSpec((tile_m, cout_pad), lambda p, i: (p * i, 0)),
            scratch_shapes=[
                pltpu.VMEM((1, cout_pad), jnp.float32),  # per-channel sum
                pltpu.VMEM((1, cout_pad), jnp.float32),  # per-channel sum of squares
                pltpu.VMEM((1, cout_pad), jnp.float32),  # folded BN scale
                pltpu.VMEM((1, cout_pad), jnp.float32),  # folded BN shift
            ],
        ),
        compiler_params=pltpu.CompilerParams(
            # Both axes are sequential: phase 1 depends on phase 0, and the
            # tile axis accumulates into shared scratch.
            dimension_semantics=("arbitrary", "arbitrary"),
            vmem_limit_bytes=32 * 1024 * 1024,
        ),
    )(x_rows, w_mat, gamma_p, beta_p)

    out = out[:M, :Cout].reshape(N, H, W, Cout)
    return jnp.transpose(out, (0, 3, 1, 2))  # back to NCHW


if __name__ == "__main__":
    key = jax.random.PRNGKey(0)
    k1, k2, k3, k4, k5 = jax.random.split(key, 5)

    N, Cin, H, W = 2, 4, 16, 16
    Cout = 8

    x = jax.random.normal(k1, (N, Cin, H, W), jnp.float32)
    w = 0.1 * jax.random.normal(k2, (Cout, Cin, 1, 1), jnp.float32)
    cbias = 0.1 * jax.random.normal(k3, (Cout,), jnp.float32)
    gamma = 1.0 + 0.1 * jax.random.normal(k4, (Cout,), jnp.float32)
    beta = 0.1 * jax.random.normal(k5, (Cout,), jnp.float32)

    out = conv_emb_forward(x, w, cbias, gamma, beta)
    out = jax.block_until_ready(out)

    # pure-JAX f32 reference (test harness only)
    conv_ref = jax.lax.conv_general_dilated(
        x, w, (1, 1), "VALID", dimension_numbers=("NCHW", "OIHW", "NCHW"))
    conv_ref = conv_ref + cbias[None, :, None, None]
    mean = conv_ref.mean(axis=(0, 2, 3), keepdims=True)
    var = conv_ref.var(axis=(0, 2, 3), keepdims=True)  # biased, training-mode BN
    ref = (conv_ref - mean) / jnp.sqrt(var + EPS)
    ref = ref * gamma[None, :, None, None] + beta[None, :, None, None]
    ref = jnp.maximum(ref, 0.0)

    assert out.shape == (N, Cout, H, W), out.shape
    # Tolerance is loose because the kernel feeds the MXU bf16 operands (per the
    # perf review) while the reference runs the conv in f32.
    assert jnp.allclose(out, ref, atol=5e-2, rtol=5e-2), float(jnp.max(jnp.abs(out - ref)))
    print("KERNEL_OK")
</pallas_src>

<mosaic_0001>
module attributes {stable_mosaic.version = 11 : i64} {
  func.func @_conv_emb_kernel(%arg0: i32, %arg1: i32, %arg2: memref<256x4xbf16, #tpu.memory_space<vmem>>, %arg3: memref<4x128xbf16, #tpu.memory_space<vmem>>, %arg4: memref<1x128xf32, #tpu.memory_space<vmem>>, %arg5: memref<1x128xf32, #tpu.memory_space<vmem>>, %arg6: memref<256x128xf32, #tpu.memory_space<vmem>>, %arg7: memref<1x128xf32, #tpu.memory_space<vmem>>, %arg8: memref<1x128xf32, #tpu.memory_space<vmem>>, %arg9: memref<1x128xf32, #tpu.memory_space<vmem>>, %arg10: memref<1x128xf32, #tpu.memory_space<vmem>>) attributes {dimension_semantics = [#tpu.dimension_semantics<arbitrary>, #tpu.dimension_semantics<arbitrary>], iteration_bounds = array<i64: 2, 2>, scalar_prefetch = 0 : i64, scratch_operands = 4 : i64, tpu.core_type = #tpu.core_type<tc>, window_params = [{transform_indices = @transform_0, window_bounds = array<i64: 256, 4>}, {pipeline_mode = #tpu.pipeline_mode<synchronous>, transform_indices = @transform_1, window_bounds = array<i64: 4, 128>}, {pipeline_mode = #tpu.pipeline_mode<synchronous>, transform_indices = @transform_2, window_bounds = array<i64: 1, 128>}, {pipeline_mode = #tpu.pipeline_mode<synchronous>, transform_indices = @transform_3, window_bounds = array<i64: 1, 128>}, {transform_indices = @transform_4, window_bounds = array<i64: 256, 128>}]} {
    %c0 = arith.constant 0 : index
    %c0_0 = arith.constant 0 : index
    %0 = vector.load %arg2[%c0, %c0_0] : memref<256x4xbf16, #tpu.memory_space<vmem>>, vector<256x4xbf16>
    %c0_1 = arith.constant 0 : index
    %c0_2 = arith.constant 0 : index
    %1 = vector.load %arg3[%c0_1, %c0_2] : memref<4x128xbf16, #tpu.memory_space<vmem>>, vector<4x128xbf16>
    %cst = arith.constant dense<0.000000e+00> : vector<256x128xf32>
    %2 = tpu.matmul %0, %1, %cst {dimension_numbers = #tpu.dot_dimension_numbers<[1], [0], [0], [1], [0, 0, 1, 1], [], []>} : vector<256x4xbf16>, vector<4x128xbf16>, vector<256x128xf32> -> vector<256x128xf32>
    %c0_i32 = arith.constant 0 : i32
    %3 = arith.cmpi eq, %arg0, %c0_i32 : i32
    %c0_i32_3 = arith.constant 0 : i32
    %4 = arith.cmpi eq, %arg1, %c0_i32_3 : i32
    %5 = arith.andi %3, %4 : i1
    %6 = arith.extui %5 : i1 to i32
    %c0_i32_4 = arith.constant 0 : i32
    %7 = arith.cmpi ne, %6, %c0_i32_4 : i32
    scf.if %7 {
      %cst_11 = arith.constant 0.000000e+00 : f32
      %19 = vector.broadcast %cst_11 : f32 to vector<1x128xf32>
      %c0_12 = arith.constant 0 : index
      %c0_13 = arith.constant 0 : index
      %20 = vector.load %arg7[%c0_12, %c0_13] : memref<1x128xf32, #tpu.memory_space<vmem>>, vector<1x128xf32>
      tpu.vector_store %arg7[%c0_12, %c0_13], %19 {strides = array<i32>} : memref<1x128xf32, #tpu.memory_space<vmem>>, vector<1x128xf32>,
      %cst_14 = arith.constant 0.000000e+00 : f32
      %21 = vector.broadcast %cst_14 : f32 to vector<1x128xf32>
      %c0_15 = arith.constant 0 : index
      %c0_16 = arith.constant 0 : index
      %22 = vector.load %arg8[%c0_15, %c0_16] : memref<1x128xf32, #tpu.memory_space<vmem>>, vector<1x128xf32>
      tpu.vector_store %arg8[%c0_15, %c0_16], %21 {strides = array<i32>} : memref<1x128xf32, #tpu.memory_space<vmem>>, vector<1x128xf32>,
    } else {
    }
    %c0_i32_5 = arith.constant 0 : i32
    %8 = arith.cmpi eq, %arg0, %c0_i32_5 : i32
    %9 = arith.extui %8 : i1 to i32
    %c0_i32_6 = arith.constant 0 : i32
    %10 = arith.cmpi ne, %9, %c0_i32_6 : i32
    scf.if %10 {
      %c0_11 = arith.constant 0 : index
      %c0_12 = arith.constant 0 : index
      %19 = vector.load %arg7[%c0_11, %c0_12] : memref<1x128xf32, #tpu.memory_space<vmem>>, vector<1x128xf32>
      %cst_13 = arith.constant dense<0.000000e+00> : vector<128xf32>
      %20 = vector.multi_reduction <add>, %2, %cst_13 [0] : vector<256x128xf32> to vector<128xf32>
      %21 = vector.shape_cast %20 : vector<128xf32> to vector<1x128xf32>
      %22 = arith.addf %19, %21 : vector<1x128xf32>
      %c0_14 = arith.constant 0 : index
      %c0_15 = arith.constant 0 : index
      %23 = vector.load %arg7[%c0_14, %c0_15] : memref<1x128xf32, #tpu.memory_space<vmem>>, vector<1x128xf32>
      tpu.vector_store %arg7[%c0_14, %c0_15], %22 {strides = array<i32>} : memref<1x128xf32, #tpu.memory_space<vmem>>, vector<1x128xf32>,
      %c0_16 = arith.constant 0 : index
      %c0_17 = arith.constant 0 : index
      %24 = vector.load %arg8[%c0_16, %c0_17] : memref<1x128xf32, #tpu.memory_space<vmem>>, vector<1x128xf32>
      %25 = arith.mulf %2, %2 : vector<256x128xf32>
      %cst_18 = arith.constant dense<0.000000e+00> : vector<128xf32>
      %26 = vector.multi_reduction <add>, %25, %cst_18 [0] : vector<256x128xf32> to vector<128xf32>
      %27 = vector.shape_cast %26 : vector<128xf32> to vector<1x128xf32>
      %28 = arith.addf %24, %27 : vector<1x128xf32>
      %c0_19 = arith.constant 0 : index
      %c0_20 = arith.constant 0 : index
      %29 = vector.load %arg8[%c0_19, %c0_20] : memref<1x128xf32, #tpu.memory_space<vmem>>, vector<1x128xf32>
      tpu.vector_store %arg8[%c0_19, %c0_20], %28 {strides = array<i32>} : memref<1x128xf32, #tpu.memory_space<vmem>>, vector<1x128xf32>,
    } else {
    }
    %c1_i32 = arith.constant 1 : i32
    %11 = arith.cmpi eq, %arg0, %c1_i32 : i32
    %c0_i32_7 = arith.constant 0 : i32
    %12 = arith.cmpi eq, %arg1, %c0_i32_7 : i32
    %13 = arith.andi %11, %12 : i1
    %14 = arith.extui %13 : i1 to i32
    %c0_i32_8 = arith.constant 0 : i32
    %15 = arith.cmpi ne, %14, %c0_i32_8 : i32
    scf.if %15 {
      %c0_11 = arith.constant 0 : index
      %c0_12 = arith.constant 0 : index
      %19 = vector.load %arg7[%c0_11, %c0_12] : memref<1x128xf32, #tpu.memory_space<vmem>>, vector<1x128xf32>
      %cst_13 = arith.constant 0.001953125 : f32
      %20 = vector.broadcast %cst_13 : f32 to vector<1x128xf32>
      %21 = arith.mulf %19, %20 : vector<1x128xf32>
      %c0_14 = arith.constant 0 : index
      %c0_15 = arith.constant 0 : index
      %22 = vector.load %arg8[%c0_14, %c0_15] : memref<1x128xf32, #tpu.memory_space<vmem>>, vector<1x128xf32>
      %cst_16 = arith.constant 0.001953125 : f32
      %23 = vector.broadcast %cst_16 : f32 to vector<1x128xf32>
      %24 = arith.mulf %22, %23 : vector<1x128xf32>
      %25 = arith.mulf %21, %21 : vector<1x128xf32>
      %26 = arith.subf %24, %25 : vector<1x128xf32>
      %c0_17 = arith.constant 0 : index
      %c0_18 = arith.constant 0 : index
      %27 = vector.load %arg4[%c0_17, %c0_18] : memref<1x128xf32, #tpu.memory_space<vmem>>, vector<1x128xf32>
      %cst_19 = arith.constant 9.99999974E-6 : f32
      %28 = vector.broadcast %cst_19 : f32 to vector<1x128xf32>
      %29 = arith.addf %26, %28 : vector<1x128xf32>
      %30 = math.rsqrt %29 : vector<1x128xf32>
      %31 = arith.mulf %27, %30 : vector<1x128xf32>
      %c0_20 = arith.constant 0 : index
      %c0_21 = arith.constant 0 : index
      %32 = vector.load %arg9[%c0_20, %c0_21] : memref<1x128xf32, #tpu.memory_space<vmem>>, vector<1x128xf32>
      tpu.vector_store %arg9[%c0_20, %c0_21], %31 {strides = array<i32>} : memref<1x128xf32, #tpu.memory_space<vmem>>, vector<1x128xf32>,
      %c0_22 = arith.constant 0 : index
      %c0_23 = arith.constant 0 : index
      %33 = vector.load %arg5[%c0_22, %c0_23] : memref<1x128xf32, #tpu.memory_space<vmem>>, vector<1x128xf32>
      %34 = arith.mulf %21, %31 : vector<1x128xf32>
      %35 = arith.subf %33, %34 : vector<1x128xf32>
      %c0_24 = arith.constant 0 : index
      %c0_25 = arith.constant 0 : index
      %36 = vector.load %arg10[%c0_24, %c0_25] : memref<1x128xf32, #tpu.memory_space<vmem>>, vector<1x128xf32>
      tpu.vector_store %arg10[%c0_24, %c0_25], %35 {strides = array<i32>} : memref<1x128xf32, #tpu.memory_space<vmem>>, vector<1x128xf32>,
    } else {
    }
    %c1_i32_9 = arith.constant 1 : i32
    %16 = arith.cmpi eq, %arg0, %c1_i32_9 : i32
    %17 = arith.extui %16 : i1 to i32
    %c0_i32_10 = arith.constant 0 : i32
    %18 = arith.cmpi ne, %17, %c0_i32_10 : i32
    scf.if %18 {
      %c0_11 = arith.constant 0 : index
      %c0_12 = arith.constant 0 : index
      %19 = vector.load %arg9[%c0_11, %c0_12] : memref<1x128xf32, #tpu.memory_space<vmem>>, vector<1x128xf32>
      %20 = vector.broadcast %19 : vector<1x128xf32> to vector<256x128xf32>
      %21 = arith.mulf %2, %20 : vector<256x128xf32>
      %c0_13 = arith.constant 0 : index
      %c0_14 = arith.constant 0 : index
      %22 = vector.load %arg10[%c0_13, %c0_14] : memref<1x128xf32, #tpu.memory_space<vmem>>, vector<1x128xf32>
      %23 = vector.broadcast %22 : vector<1x128xf32> to vector<256x128xf32>
      %24 = arith.addf %21, %23 : vector<256x128xf32>
      %cst_15 = arith.constant 0.000000e+00 : f32
      %25 = vector.broadcast %cst_15 : f32 to vector<256x128xf32>
      %26 = arith.maximumf %24, %25 : vector<256x128xf32>
      %c0_16 = arith.constant 0 : index
      %c0_17 = arith.constant 0 : index
      %27 = vector.load %arg6[%c0_16, %c0_17] : memref<256x128xf32, #tpu.memory_space<vmem>>, vector<256x128xf32>
      tpu.vector_store %arg6[%c0_16, %c0_17], %26 {strides = array<i32>} : memref<256x128xf32, #tpu.memory_space<vmem>>, vector<256x128xf32>,
    } else {
    }
    return
  }
  func.func @transform_0(%arg0: i32, %arg1: i32) -> (i32, i32) {
    %c0_i32 = arith.constant 0 : i32
    %c0_i32_0 = arith.constant 0 : i32
    return %arg1, %c0_i32 : i32, i32
  }
  func.func @transform_1(%arg0: i32, %arg1: i32) -> (i32, i32) {
    %c0_i32 = arith.constant 0 : i32
    %c0_i32_0 = arith.constant 0 : i32
    %c0_i32_1 = arith.constant 0 : i32
    return %c0_i32, %c0_i32_0 : i32, i32
  }
  func.func @transform_2(%arg0: i32, %arg1: i32) -> (i32, i32) {
    %c0_i32 = arith.constant 0 : i32
    %c0_i32_0 = arith.constant 0 : i32
    %c0_i32_1 = arith.constant 0 : i32
    return %c0_i32, %c0_i32_0 : i32, i32
  }
  func.func @transform_3(%arg0: i32, %arg1: i32) -> (i32, i32) {
    %c0_i32 = arith.constant 0 : i32
    %c0_i32_0 = arith.constant 0 : i32
    %c0_i32_1 = arith.constant 0 : i32
    return %c0_i32, %c0_i32_0 : i32, i32
  }
  func.func @transform_4(%arg0: i32, %arg1: i32) -> (i32, i32) {
    %0 = arith.muli %arg0, %arg1 : i32
    %c0_i32 = arith.constant 0 : i32
    %c0_i32_0 = arith.constant 0 : i32
    return %0, %c0_i32 : i32, i32
  }
}

</mosaic_0001>

<llo_original>
// kernel: tpu_custom_call.1
$region0: #{tpu_custom_call.1}
  #allocation0 [shape = 'u32[]', space=smem, size = 0x4, offset = 0x4, fixed_abs, tag = 'smem constant byte address 0x4 - core index']
  #allocation1 [shape = 'u32[144,128]{1,0:T(1,128)}', space=vmem, size = 0x12000, scoped, tag = 'internal scratch']
  #allocation2 [shape = 'f32[1,128]{1,0:T(1,128)}', space=vmem, size = 0x200, scoped, tag = 'scratch operand']
  #allocation3 [shape = 'f32[1,128]{1,0:T(1,128)}', space=vmem, size = 0x200, scoped, tag = 'scratch operand']
  #allocation4 [shape = 'f32[1,128]{1,0:T(1,128)}', space=vmem, size = 0x200, scoped, tag = 'scratch operand']
  #allocation5 [shape = 'f32[1,128]{1,0:T(1,128)}', space=vmem, size = 0x200, scoped, tag = 'scratch operand']
  %s0 = inlined_call_operand.vmem [shape: bf16[512,4], index: 0, kind: input, shape index: {}]
  %s1 = inlined_call_operand.vmem [shape: bf16[4,128], index: 1, kind: input, shape index: {}]
  %s2 = inlined_call_operand.vmem [shape: f32[1,128], index: 2, kind: input, shape index: {}]
  %s3 = inlined_call_operand.vmem [shape: f32[1,128], index: 3, kind: input, shape index: {}]
  %s4 = inlined_call_operand.hbm [shape: f32[512,128], index: 4, kind: output, shape index: {}]
  %s5 = sld [smem:[#allocation0]]
  $region65: #{tpu_custom_call.1} parent=0
    _
  %s7 = ssub.s32 1, %s5
  %s8 = scalar_select 0, %s7, %s5
  $region1: #{tpu_custom_call.1} parent=0
    #allocation6 [shape = 'u8[262144]{0}', space=vmem, size = 0x40000, scoped, tag = 'output window, operand 0']
    #allocation7 [shape = 's32[2]{0}', space=sflag, size = 0x8, scoped, tag = 'scoped memory for tpu_custom_call.1']
    %9 = vsyncpa [#allocation7], 0
    %s10 = scalar_lea.sflag [#allocation7], 1
    %11 = vsyncpa %s10, 0
    loop: start=0, step=1, limit=6
    $region2: #{tpu_custom_call.1} parent=1 // loop_pre_header
      _
    $region3: #{tpu_custom_call.1} parent=1 // loop_header
      %s13 = sphi 0, %s17
      %p14 = scmp.ge.s32.totalorder %s13, 6
      %s20 = sphi 0, %s32
      %s21 = sphi 0, %s28
      %s22 = sphi 0, %s20
      %s23 = sphi 0, %s21
      %s24 = sphi 0, %s22
      %s25 = sphi 0, %s23
      %s35 = sphi 0, %s37
      %s38 = sphi 0, %s35
      %s39 = sphi 0, %s38
      %s55 = sphi 0, %s39
      %s59 = sphi 0, %s59
      %s61 = sphi 0, %s59
      %s62 = sphi 0, %s61
      %s76 = sphi 0, %s62
      %s80 = sphi 0, %s80
      %s82 = sphi 0, %s80
      %s83 = sphi 0, %s82
      %s97 = sphi 0, %s83
      %s101 = sphi 0, %s101
      %s103 = sphi 0, %s101
      %s104 = sphi 0, %s103
      %s118 = sphi 0, %s104
      %s126 = sphi 0, %s128
      %s129 = sphi 0, %s126
      %s130 = sphi 0, %s129
      %s146 = sphi 0, %s130
    $region4: #{tpu_custom_call.1} parent=1 // loop_header_branch
      %16 = sbr.rel (%p14) target = $region8
    $region5: #{tpu_custom_call.1} parent=1 // loop_body
      %s18 = ssub.s32 %s13, 1
      %s19 = ssub.s32 %s13, 2
      %s26 = sadd.s32 1, %s21
      %p27 = scmp.ge.s32.totalorder %s26, 2
      %s28 = scalar_select %p27, 0, %s26
      %s29 = sadd.s32 1, %s20
      %s30 = scalar_select %p27, %s29, %s20
      %p31 = scmp.ge.s32.totalorder %s30, 2
      %s32 = scalar_select %p31, 0, %s30
      %s33 = ssub.s32 %s21, %s28
      %p34 = scmp.eq.s32.totalorder %s33, 0
      %s36 = sadd.s32 %s35, 1
      %s37 = scalar_select %p34, %s35, %s36
      %p40 = pneg %p34
      %p41 = scmp.eq.s32.totalorder %s13, 3
      %p42 = por %p40, %p41
      %p43 = scmp.ne.s32.totalorder %s35, %s38
      %p44 = scmp.eq.s32.totalorder %s13, 0
      %p45 = por %p43, %p44
      %p46 = scmp.ne.s32.totalorder %s35, %s38
      %p47 = scmp.eq.s32.totalorder %s18, 3
      %p48 = por %p46, %p47
      %p49 = scmp.ne.s32.totalorder %s38, %s39
      %p50 = scmp.eq.s32.totalorder %s18, 0
      %p51 = por %p49, %p50
      %p52 = scmp.ne.s32.totalorder %s38, %s39
      %p53 = scmp.eq.s32.totalorder %s19, 3
      %p54 = por %p52, %p53
      %p56 = scmp.ne.s32.totalorder %s39, %s55
      %p57 = scmp.eq.s32.totalorder %s19, 0
      %p58 = por %p56, %p57
      %s60 = sadd.s32 %s59, 1
      %p63 = scmp.eq.s32.totalorder %s13, 3
      %p64 = scmp.ne.s32.totalorder %s59, %s61
      %p65 = scmp.eq.s32.totalorder %s13, 0
      %p66 = por %p64, %p65
      %p67 = scmp.ne.s32.totalorder %s59, %s61
      %p68 = scmp.eq.s32.totalorder %s18, 3
      %p69 = por %p67, %p68
      %p70 = scmp.ne.s32.totalorder %s61, %s62
      %p71 = scmp.eq.s32.totalorder %s18, 0
      %p72 = por %p70, %p71
      %p73 = scmp.ne.s32.totalorder %s61, %s62
      %p74 = scmp.eq.s32.totalorder %s19, 3
      %p75 = por %p73, %p74
      %p77 = scmp.ne.s32.totalorder %s62, %s76
      %p78 = scmp.eq.s32.totalorder %s19, 0
      %p79 = por %p77, %p78
      %s81 = sadd.s32 %s80, 1
      %p84 = scmp.eq.s32.totalorder %s13, 3
      %p85 = scmp.ne.s32.totalorder %s80, %s82
      %p86 = scmp.eq.s32.totalorder %s13, 0
      %p87 = por %p85, %p86
      %p88 = scmp.ne.s32.totalorder %s80, %s82
      %p89 = scmp.eq.s32.totalorder %s18, 3
      %p90 = por %p88, %p89
      %p91 = scmp.ne.s32.totalorder %s82, %s83
      %p92 = scmp.eq.s32.totalorder %s18, 0
      %p93 = por %p91, %p92
      %p94 = scmp.ne.s32.totalorder %s82, %s83
      %p95 = scmp.eq.s32.totalorder %s19, 3
      %p96 = por %p94, %p95
      %p98 = scmp.ne.s32.totalorder %s83, %s97
      %p99 = scmp.eq.s32.totalorder %s19, 0
      %p100 = por %p98, %p99
      %s102 = sadd.s32 %s101, 1
      %p105 = scmp.eq.s32.totalorder %s13, 3
      %p106 = scmp.ne.s32.totalorder %s101, %s103
      %p107 = scmp.eq.s32.totalorder %s13, 0
      %p108 = por %p106, %p107
      %p109 = scmp.ne.s32.totalorder %s101, %s103
      %p110 = scmp.eq.s32.totalorder %s18, 3
      %p111 = por %p109, %p110
      %p112 = scmp.ne.s32.totalorder %s103, %s104
      %p113 = scmp.eq.s32.totalorder %s18, 0
      %p114 = por %p112, %p113
      %p115 = scmp.ne.s32.totalorder %s103, %s104
      %p116 = scmp.eq.s32.totalorder %s19, 3
      %p117 = por %p115, %p116
      %p119 = scmp.ne.s32.totalorder %s104, %s118
      %p120 = scmp.eq.s32.totalorder %s19, 0
      %p121 = por %p119, %p120
      %s122 = smul.u32 %s20, %s21
      %s123 = smul.u32 %s32, %s28
      %s124 = ssub.s32 %s122, %s123
      %p125 = scmp.eq.s32.totalorder %s124, 0
      %s127 = sadd.s32 %s126, 1
      %s128 = scalar_select %p125, %s126, %s127
      %p131 = pneg %p125
      %p132 = scmp.eq.s32.totalorder %s13, 3
      %p133 = por %p131, %p132
      %p134 = scmp.ne.s32.totalorder %s126, %s129
      %p135 = scmp.eq.s32.totalorder %s13, 0
      %p136 = por %p134, %p135
      %p137 = scmp.ne.s32.totalorder %s126, %s129
      %p138 = scmp.eq.s32.totalorder %s18, 3
      %p139 = por %p137, %p138
      %p140 = scmp.ne.s32.totalorder %s129, %s130
      %p141 = scmp.eq.s32.totalorder %s18, 0
      %p142 = por %p140, %p141
      %p143 = scmp.ne.s32.totalorder %s129, %s130
      %p144 = scmp.eq.s32.totalorder %s19, 3
      %p145 = por %p143, %p144
      %p147 = scmp.ne.s32.totalorder %s130, %s146
      %p148 = scmp.eq.s32.totalorder %s19, 0
      %p149 = por %p147, %p148
      %p150 = scmp.le.s32.totalorder 1, %s13
      %p151 = scmp.lt.s32.totalorder %s13, 5
      %p152 = pnand %p150, %p151
      %p153 = pneg %p152
      // Predicated region
      $region9: #{tpu_custom_call.1} parent=5 // pred_check
        _
      $region10: #{tpu_custom_call.1} parent=5 // pred_check_branch
        %155 = sbr.rel (%p152) target = $region12
      $region11: #{tpu_custom_call.1} parent=5 // pred_region
        %s156 = ssub.s32 %s13, 1
        // Predicated region
        $region13: #{tpu_custom_call.1} parent=11 // pred_check
          %p157 = pneg %p72
        $region14: #{tpu_custom_call.1} parent=11 // pred_check_branch
          %159 = sbr.rel (%p157) target = $region16
        $region15: #{tpu_custom_call.1} parent=11 // pred_region
          _
        $region16: #{tpu_custom_call.1} parent=11 // pred_fallthru
          _
        // Predicated region
        $region17: #{tpu_custom_call.1} parent=11 // pred_check
          %p160 = pneg %p93
        $region18: #{tpu_custom_call.1} parent=11 // pred_check_branch
          %162 = sbr.rel (%p160) target = $region20
        $region19: #{tpu_custom_call.1} parent=11 // pred_region
          _
        $region20: #{tpu_custom_call.1} parent=11 // pred_fallthru
          _
        // Predicated region
        $region21: #{tpu_custom_call.1} parent=11 // pred_check
          %p163 = pneg %p114
        $region22: #{tpu_custom_call.1} parent=11 // pred_check_branch
          %165 = sbr.rel (%p163) target = $region24
        $region23: #{tpu_custom_call.1} parent=11 // pred_region
          _
        $region24: #{tpu_custom_call.1} parent=11 // pred_fallthru
          _
      $region12: #{tpu_custom_call.1} parent=5 // pred_fallthru
        _
      %p166 = scmp.lt.s32.totalorder %s13, 4
      // Predicated region
      $region25: #{tpu_custom_call.1} parent=5 // pred_check
        %p167 = pneg %p166
      $region26: #{tpu_custom_call.1} parent=5 // pred_check_branch
        %169 = sbr.rel (%p167) target = $region28
      $region27: #{tpu_custom_call.1} parent=5 // pred_region
        // Predicated region
        $region29: #{tpu_custom_call.1} parent=27 // pred_check
          %p170 = pneg %p45
        $region30: #{tpu_custom_call.1} parent=27 // pred_check_branch
          %172 = sbr.rel (%p170) target = $region32
        $region31: #{tpu_custom_call.1} parent=27 // pred_region
          %s173 = smul.u32 32, %s21
          %p174 = scmp.lt.s32.totalorder %s173, 63
          %s175 = scalar_select %p174, %s173, 63
          %s176 = smul.addr %s175, 4
          %s177 = scalar_lea.vmem %s0, %s176
          %s178 = smul.u32 32, %s21
        $region32: #{tpu_custom_call.1} parent=27 // pred_fallthru
          _
      $region28: #{tpu_custom_call.1} parent=5 // pred_fallthru
        _
      %p179 = scmp.le.s32.totalorder 1, %s13
      %p180 = scmp.lt.s32.totalorder %s13, 5
      %p181 = pnand %p179, %p180
      %p182 = pneg %p181
      // Predicated region
      $region33: #{tpu_custom_call.1} parent=5 // pred_check
        _
      $region34: #{tpu_custom_call.1} parent=5 // pred_check_branch
        %184 = sbr.rel (%p181) target = $region36
      $region35: #{tpu_custom_call.1} parent=5 // pred_region
        %s185 = ssub.s32 %s13, 1
        %s186 = smul.u32 32, %s23
        %p187 = scmp.lt.s32.totalorder %s186, 63
        %s188 = scalar_select %p187, %s186, 63
        %s189 = smul.addr %s188, 4
        %s190 = scalar_lea.vmem %s0, %s189
        %p191 = pneg %p51
        %p192 = pneg %p48
        %p193 = pneg %p72
        %p194 = pneg %p69
        %p195 = pneg %p93
        %p196 = pneg %p90
        %p197 = pneg %p114
        %p198 = pneg %p111
        %p199 = pneg %p142
        %p200 = pneg %p139
        %s201 = sand.u32 %s129, 1
        %s202 = scalar_lea.sflag [#allocation7], %s201
        %s203 = sand.u32 %s129, 1
        %s204 = smul.addr %s203, 256
        %s205 = scalar_lea.vmem [#allocation6], %s204
        %s206 = smul.u32 32, %s23
        %p207 = scmp.lt.s32.totalorder %s206, 63
        %s208 = scalar_select %p207, %s206, 63
        %s209 = smul.addr %s208, 4
        %s210 = scalar_lea.vmem %s0, %s209
        %s211 = smul.u32 32, %s23
        %s212 = smul.u32 %s22, %s23
        %s213 = smul.u32 32, %s212
        %v215 = vld [vmem:[%s210] sm:$0xf]
        %v216 = vld [vmem:[%s210 + $0x4] sm:$0xf]
        %v217 = vld [vmem:[%s210 + $0x8] sm:$0xf]
        %v218 = vld [vmem:[%s210 + $0xc] sm:$0xf]
        %v219 = vld [vmem:[%s210 + $0x10] sm:$0xf]
        %v220 = vld [vmem:[%s210 + $0x14] sm:$0xf]
        %v221 = vld [vmem:[%s210 + $0x18] sm:$0xf]
        %v222 = vld [vmem:[%s210 + $0x1c] sm:$0xf]
        %v223 = vld [vmem:[%s210 + $0x20] sm:$0xf]
        %v224 = vld [vmem:[%s210 + $0x24] sm:$0xf]
        %v225 = vld [vmem:[%s210 + $0x28] sm:$0xf]
        %v226 = vld [vmem:[%s210 + $0x2c] sm:$0xf]
        %v227 = vld [vmem:[%s210 + $0x30] sm:$0xf]
        %v228 = vld [vmem:[%s210 + $0x34] sm:$0xf]
        %v229 = vld [vmem:[%s210 + $0x38] sm:$0xf]
        %v230 = vld [vmem:[%s210 + $0x3c] sm:$0xf]
        %v231 = vld [vmem:[%s210 + $0x40] sm:$0xf]
        %v232 = vld [vmem:[%s210 + $0x44] sm:$0xf]
        %v233 = vld [vmem:[%s210 + $0x48] sm:$0xf]
        %v234 = vld [vmem:[%s210 + $0x4c] sm:$0xf]
        %v235 = vld [vmem:[%s210 + $0x50] sm:$0xf]
        %v236 = vld [vmem:[%s210 + $0x54] sm:$0xf]
        %v237 = vld [vmem:[%s210 + $0x58] sm:$0xf]
        %v238 = vld [vmem:[%s210 + $0x5c] sm:$0xf]
        %v239 = vld [vmem:[%s210 + $0x60] sm:$0xf]
        %v240 = vld [vmem:[%s210 + $0x64] sm:$0xf]
        %v241 = vld [vmem:[%s210 + $0x68] sm:$0xf]
        %v242 = vld [vmem:[%s210 + $0x6c] sm:$0xf]
        %v243 = vld [vmem:[%s210 + $0x70] sm:$0xf]
        %v244 = vld [vmem:[%s210 + $0x74] sm:$0xf]
        %v245 = vld [vmem:[%s210 + $0x78] sm:$0xf]
        %v246 = vld [vmem:[%s210 + $0x7c] sm:$0xf]
        %v247 = vld [vmem:[%s1] sm:$0x3]
        %v280 = vunpack.c.l.b16 %v215
        %v281 = vunpack.c.l.b16 %v216
        %v282 = vunpack.c.l.b16 %v217
        %v283 = vunpack.c.l.b16 %v218
        %v284 = vunpack.c.l.b16 %v219
        %v285 = vunpack.c.l.b16 %v220
        %v286 = vunpack.c.l.b16 %v221
        %v287 = vunpack.c.l.b16 %v222
        %v288 = vunpack.c.l.b16 %v223
        %v289 = vunpack.c.l.b16 %v224
        %v290 = vunpack.c.l.b16 %v225
        %v291 = vunpack.c.l.b16 %v226
        %v292 = vunpack.c.l.b16 %v227
        %v293 = vunpack.c.l.b16 %v228
        %v294 = vunpack.c.l.b16 %v229
        %v295 = vunpack.c.l.b16 %v230
        %v296 = vunpack.c.l.b16 %v231
        %v297 = vunpack.c.l.b16 %v232
        %v298 = vunpack.c.l.b16 %v233
        %v299 = vunpack.c.l.b16 %v234
        %v300 = vunpack.c.l.b16 %v235
        %v301 = vunpack.c.l.b16 %v236
        %v302 = vunpack.c.l.b16 %v237
        %v303 = vunpack.c.l.b16 %v238
        %v304 = vunpack.c.l.b16 %v239
        %v305 = vunpack.c.l.b16 %v240
        %v306 = vunpack.c.l.b16 %v241
        %v307 = vunpack.c.l.b16 %v242
        %v308 = vunpack.c.l.b16 %v243
        %v309 = vunpack.c.l.b16 %v244
        %v310 = vunpack.c.l.b16 %v245
        %v311 = vunpack.c.l.b16 %v246
        %v312 = vpack.c.b16 %v281, %v280
        %v313 = vpack.c.b16 %v283, %v282
        %v314 = vpack.c.b16 %v285, %v284
        %v315 = vpack.c.b16 %v287, %v286
        %v316 = vpack.c.b16 %v289, %v288
        %v317 = vpack.c.b16 %v291, %v290
        %v318 = vpack.c.b16 %v293, %v292
        %v319 = vpack.c.b16 %v295, %v294
        %v320 = vpack.c.b16 %v297, %v296
        %v321 = vpack.c.b16 %v299, %v298
        %v322 = vpack.c.b16 %v301, %v300
        %v323 = vpack.c.b16 %v303, %v302
        %v324 = vpack.c.b16 %v305, %v304
        %v325 = vpack.c.b16 %v307, %v306
        %v326 = vpack.c.b16 %v309, %v308
        %v327 = vpack.c.b16 %v311, %v310
        %vm328 = vcmask 31744
        %v330 = vsel %vm328, %v312, 0
        %v333 = vsel %vm328, %v313, 0
        %v336 = vsel %vm328, %v314, 0
        %v339 = vsel %vm328, %v315, 0
        %v342 = vsel %vm328, %v316, 0
        %v345 = vsel %vm328, %v317, 0
        %v348 = vsel %vm328, %v318, 0
        %v351 = vsel %vm328, %v319, 0
        %v354 = vsel %vm328, %v320, 0
        %v357 = vsel %vm328, %v321, 0
        %v360 = vsel %vm328, %v322, 0
        %v363 = vsel %vm328, %v323, 0
        %v366 = vsel %vm328, %v324, 0
        %v369 = vsel %vm328, %v325, 0
        %v372 = vsel %vm328, %v326, 0
        %v375 = vsel %vm328, %v327, 0
        %vm377 = vcmask 1041408
        %v379 = vsel %vm377, %v247, 0
        %381 = vmatprep.subr.bf16.mxu0 0
        %382 = vmatpush1.bf16.msra.mxu0 0
        %383 = vmatprep.subr.bf16.mxu0 0
        %384 = vmatpush1.bf16.msra.mxu0 0
        %385 = vmatprep.subr.bf16.mxu0 0
        %386 = vmatpush1.bf16.msra.mxu0 0
        %387 = vmatprep.subr.bf16.mxu0 0
        %388 = vmatpush1.bf16.msra.mxu0 0
        %389 = vmatprep.subr.bf16.mxu0 0
        %390 = vmatpush1.bf16.msra.mxu0 0
        %391 = vmatprep.subr.bf16.mxu0 0
        %392 = vmatpush1.bf16.msra.mxu0 0
        %393 = vmatprep.subr.bf16.mxu0 0
        %394 = vmatpush1.bf16.msra.mxu0 0
        %395 = vmatprep.subr.bf16.mxu0 0
        %396 = vmatpush1.bf16.msra.mxu0 %v379
        %397 = vmatprep.subr.bf16.mxu0 0
        %398 = vmatpush2.bf16.msra.mxu0 0
        %399 = vmatprep.subr.bf16.mxu0 0
        %400 = vmatpush2.bf16.msra.mxu0 0
        %401 = vmatprep.subr.bf16.mxu0 0
        %402 = vmatpush2.bf16.msra.mxu0 0
        %403 = vmatprep.subr.bf16.mxu0 0
        %404 = vmatpush2.bf16.msra.mxu0 0
        %405 = vmatprep.subr.bf16.mxu0 0
        %406 = vmatpush2.bf16.msra.mxu0 0
        %407 = vmatprep.subr.bf16.mxu0 0
        %408 = vmatpush2.bf16.msra.mxu0 0
        %409 = vmatprep.subr.bf16.mxu0 0
        %410 = vmatpush2.bf16.msra.mxu0 0
        %411 = vmatprep.subr.bf16.mxu0 0
        %412 = vmatpush2.bf16.msra.mxu0 0
        %413 = vmatprep.mubr.bf16.mxu0 0
        %414 = vmatmul.mubr.bf16.gmra.mxu0 %v330
        %v415 = vpop.f32.mrf.mxu0
        %v416 = vadd.f32 0.0, %v415
        %v417 = vpop.f32.mrf.mxu0
        %v418 = vpop.f32.mrf.mxu0
        %v419 = vadd.f32 0.0, %v418
        %v420 = vpop.f32.mrf.mxu0
        %421 = vmatprep.mubr.bf16.mxu0 0
        %422 = vmatmul.mubr.bf16.gmra.mxu0 %v333
        %v423 = vpop.f32.mrf.mxu0
        %v424 = vadd.f32 0.0, %v423
        %v425 = vpop.f32.mrf.mxu0
        %v426 = vpop.f32.mrf.mxu0
        %v427 = vadd.f32 0.0, %v426
        %v428 = vpop.f32.mrf.mxu0
        %429 = vmatprep.mubr.bf16.mxu0 0
        %430 = vmatmul.mubr.bf16.gmra.mxu0 %v336
        %v431 = vpop.f32.mrf.mxu0
        %v432 = vadd.f32 0.0, %v431
        %v433 = vpop.f32.mrf.mxu0
        %v434 = vpop.f32.mrf.mxu0
        %v435 = vadd.f32 0.0, %v434
        %v436 = vpop.f32.mrf.mxu0
        %437 = vmatprep.mubr.bf16.mxu0 0
        %438 = vmatmul.mubr.bf16.gmra.mxu0 %v339
        %v439 = vpop.f32.mrf.mxu0
        %v440 = vadd.f32 0.0, %v439
        %v441 = vpop.f32.mrf.mxu0
        %v442 = vpop.f32.mrf.mxu0
        %v443 = vadd.f32 0.0, %v442
        %v444 = vpop.f32.mrf.mxu0
        %445 = vmatprep.mubr.bf16.mxu0 0
        %446 = vmatmul.mubr.bf16.gmra.mxu0 %v342
        %v447 = vpop.f32.mrf.mxu0
        %v448 = vadd.f32 0.0, %v447
        %v449 = vpop.f32.mrf.mxu0
        %v450 = vpop.f32.mrf.mxu0
        %v451 = vadd.f32 0.0, %v450
        %v452 = vpop.f32.mrf.mxu0
        %453 = vmatprep.mubr.bf16.mxu0 0
        %454 = vmatmul.mubr.bf16.gmra.mxu0 %v345
        %v455 = vpop.f32.mrf.mxu0
        %v456 = vadd.f32 0.0, %v455
        %v457 = vpop.f32.mrf.mxu0
        %v458 = vpop.f32.mrf.mxu0
        %v459 = vadd.f32 0.0, %v458
        %v460 = vpop.f32.mrf.mxu0
        %461 = vmatprep.mubr.bf16.mxu0 0
        %462 = vmatmul.mubr.bf16.gmra.mxu0 %v348
        %v463 = vpop.f32.mrf.mxu0
        %v464 = vadd.f32 0.0, %v463
        %v465 = vpop.f32.mrf.mxu0
        %v466 = vpop.f32.mrf.mxu0
        %v467 = vadd.f32 0.0, %v466
        %v468 = vpop.f32.mrf.mxu0
        %469 = vmatprep.mubr.bf16.mxu0 0
        %470 = vmatmul.mubr.bf16.gmra.mxu0 %v351
        %v471 = vpop.f32.mrf.mxu0
        %v472 = vadd.f32 0.0, %v471
        %v473 = vpop.f32.mrf.mxu0
        %v474 = vpop.f32.mrf.mxu0
        %v475 = vadd.f32 0.0, %v474
        %v476 = vpop.f32.mrf.mxu0
        %477 = vmatprep.mubr.bf16.mxu0 0
        %478 = vmatmul.mubr.bf16.gmra.mxu0 %v354
        %v479 = vpop.f32.mrf.mxu0
        %v480 = vadd.f32 0.0, %v479
        %v481 = vpop.f32.mrf.mxu0
        %v482 = vpop.f32.mrf.mxu0
        %v483 = vadd.f32 0.0, %v482
        %v484 = vpop.f32.mrf.mxu0
        %485 = vmatprep.mubr.bf16.mxu0 0
        %486 = vmatmul.mubr.bf16.gmra.mxu0 %v357
        %v487 = vpop.f32.mrf.mxu0
        %v488 = vadd.f32 0.0, %v487
        %v489 = vpop.f32.mrf.mxu0
        %v490 = vpop.f32.mrf.mxu0
        %v491 = vadd.f32 0.0, %v490
        %v492 = vpop.f32.mrf.mxu0
        %493 = vmatprep.mubr.bf16.mxu0 0
        %494 = vmatmul.mubr.bf16.gmra.mxu0 %v360
        %v495 = vpop.f32.mrf.mxu0
        %v496 = vadd.f32 0.0, %v495
        %v497 = vpop.f32.mrf.mxu0
        %v498 = vpop.f32.mrf.mxu0
        %v499 = vadd.f32 0.0, %v498
        %v500 = vpop.f32.mrf.mxu0
        %501 = vmatprep.mubr.bf16.mxu0 0
        %502 = vmatmul.mubr.bf16.gmra.mxu0 %v363
        %v503 = vpop.f32.mrf.mxu0
        %v504 = vadd.f32 0.0, %v503
        %v505 = vpop.f32.mrf.mxu0
        %v506 = vpop.f32.mrf.mxu0
        %v507 = vadd.f32 0.0, %v506
        %v508 = vpop.f32.mrf.mxu0
        %509 = vmatprep.mubr.bf16.mxu0 0
        %510 = vmatmul.mubr.bf16.gmra.mxu0 %v366
        %v511 = vpop.f32.mrf.mxu0
        %v512 = vadd.f32 0.0, %v511
        %v513 = vpop.f32.mrf.mxu0
        %v514 = vpop.f32.mrf.mxu0
        %v515 = vadd.f32 0.0, %v514
        %v516 = vpop.f32.mrf.mxu0
        %517 = vmatprep.mubr.bf16.mxu0 0
        %518 = vmatmul.mubr.bf16.gmra.mxu0 %v369
        %v519 = vpop.f32.mrf.mxu0
        %v520 = vadd.f32 0.0, %v519
        %v521 = vpop.f32.mrf.mxu0
        %v522 = vpop.f32.mrf.mxu0
        %v523 = vadd.f32 0.0, %v522
        %v524 = vpop.f32.mrf.mxu0
        %525 = vmatprep.mubr.bf16.mxu0 0
        %526 = vmatmul.mubr.bf16.gmra.mxu0 %v372
        %v527 = vpop.f32.mrf.mxu0
        %v528 = vadd.f32 0.0, %v527
        %v529 = vpop.f32.mrf.mxu0
        %v530 = vpop.f32.mrf.mxu0
        %v531 = vadd.f32 0.0, %v530
        %v532 = vpop.f32.mrf.mxu0
        %533 = vmatprep.mubr.bf16.mxu0 0
        %534 = vmatmul.mubr.bf16.gmra.mxu0 %v375
        %v535 = vpop.f32.mrf.mxu0
        %v536 = vadd.f32 0.0, %v535
        %v537 = vpop.f32.mrf.mxu0
        %v538 = vpop.f32.mrf.mxu0
        %v539 = vadd.f32 0.0, %v538
        %v540 = vpop.f32.mrf.mxu0
        %541 = vdwg.mxu0
        %p542 = scmp.eq.s32.totalorder %s22, 0
        %p543 = scmp.eq.s32.totalorder %s23, 0
        %p544 = pnand %p542, %p543
        %p545 = pneg %p544
        // Predicated region
        $region37: #{tpu_custom_call.1} parent=35 // pred_check
          _
        $region38: #{tpu_custom_call.1} parent=35 // pred_check_branch
          %547 = sbr.rel (%p544) target = $region40
        $region39: #{tpu_custom_call.1} parent=35 // pred_region
          %548 = vst [vmem:[#allocation2] sm:$0x1] 0.0
          %549 = vst [vmem:[#allocation3] sm:$0x1] 0.0
        $region40: #{tpu_custom_call.1} parent=35 // pred_fallthru
          _
        // Predicated region
        $region41: #{tpu_custom_call.1} parent=35 // pred_check
          %p550 = pneg %p542
        $region42: #{tpu_custom_call.1} parent=35 // pred_check_branch
          %552 = sbr.rel (%p550) target = $region44
        $region43: #{tpu_custom_call.1} parent=35 // pred_region
          %v553 = vld [vmem:[#allocation2] sm:$0x1]
          %v554 = vadd.f32 %v416, %v419
          %v555 = vadd.f32 %v554, %v424
          %v556 = vadd.f32 %v555, %v427
          %v557 = vadd.f32 %v556, %v432
          %v558 = vadd.f32 %v557, %v435
          %v559 = vadd.f32 %v558, %v440
          %v560 = vadd.f32 %v559, %v443
          %v561 = vadd.f32 %v560, %v448
          %v562 = vadd.f32 %v561, %v451
          %v563 = vadd.f32 %v562, %v456
          %v564 = vadd.f32 %v563, %v459
          %v565 = vadd.f32 %v564, %v464
          %v566 = vadd.f32 %v565, %v467
          %v567 = vadd.f32 %v566, %v472
          %v568 = vadd.f32 %v567, %v475
          %v569 = vadd.f32 %v568, %v480
          %v570 = vadd.f32 %v569, %v483
          %v571 = vadd.f32 %v570, %v488
          %v572 = vadd.f32 %v571, %v491
          %v573 = vadd.f32 %v572, %v496
          %v574 = vadd.f32 %v573, %v499
          %v575 = vadd.f32 %v574, %v504
          %v576 = vadd.f32 %v575, %v507
          %v577 = vadd.f32 %v576, %v512
          %v578 = vadd.f32 %v577, %v515
          %v579 = vadd.f32 %v578, %v520
          %v580 = vadd.f32 %v579, %v523
          %v581 = vadd.f32 %v580, %v528
          %v582 = vadd.f32 %v581, %v531
          %v583 = vadd.f32 %v582, %v536
          %v584 = vadd.f32 %v583, %v539
          %v585 = vrot.slane %v584, 4
          %v586 = vadd.f32 %v584, %v585
          %v587 = vrot.slane %v586, 2
          %v588 = vadd.f32 %v586, %v587
          %v589 = vrot.slane %v588, 1
          %v590 = vadd.f32 %v588, %v589
          %v591 = vadd.f32 %v553, %v590
          %592 = vst [vmem:[#allocation2] sm:$0x1] %v591
          %v593 = vld [vmem:[#allocation3] sm:$0x1]
          %v594 = vmul.f32 %v416, %v416
          %v595 = vmul.f32 %v419, %v419
          %v596 = vmul.f32 %v424, %v424
          %v597 = vmul.f32 %v427, %v427
          %v598 = vmul.f32 %v432, %v432
          %v599 = vmul.f32 %v435, %v435
          %v600 = vmul.f32 %v440, %v440
          %v601 = vmul.f32 %v443, %v443
          %v602 = vmul.f32 %v448, %v448
          %v603 = vmul.f32 %v451, %v451
          %v604 = vmul.f32 %v456, %v456
          %v605 = vmul.f32 %v459, %v459
          %v606 = vmul.f32 %v464, %v464
          %v607 = vmul.f32 %v467, %v467
          %v608 = vmul.f32 %v472, %v472
          %v609 = vmul.f32 %v475, %v475
          %v610 = vmul.f32 %v480, %v480
          %v611 = vmul.f32 %v483, %v483
          %v612 = vmul.f32 %v488, %v488
          %v613 = vmul.f32 %v491, %v491
          %v614 = vmul.f32 %v496, %v496
          %v615 = vmul.f32 %v499, %v499
          %v616 = vmul.f32 %v504, %v504
          %v617 = vmul.f32 %v507, %v507
          %v618 = vmul.f32 %v512, %v512
          %v619 = vmul.f32 %v515, %v515
          %v620 = vmul.f32 %v520, %v520
          %v621 = vmul.f32 %v523, %v523
          %v622 = vmul.f32 %v528, %v528
          %v623 = vmul.f32 %v531, %v531
          %v624 = vmul.f32 %v536, %v536
          %v625 = vmul.f32 %v539, %v539
          %v626 = vadd.f32 %v594, %v595
          %v627 = vadd.f32 %v626, %v596
          %v628 = vadd.f32 %v627, %v597
          %v629 = vadd.f32 %v628, %v598
          %v630 = vadd.f32 %v629, %v599
          %v631 = vadd.f32 %v630, %v600
          %v632 = vadd.f32 %v631, %v601
          %v633 = vadd.f32 %v632, %v602
          %v634 = vadd.f32 %v633, %v603
          %v635 = vadd.f32 %v634, %v604
          %v636 = vadd.f32 %v635, %v605
          %v637 = vadd.f32 %v636, %v606
          %v638 = vadd.f32 %v637, %v607
          %v639 = vadd.f32 %v638, %v608
          %v640 = vadd.f32 %v639, %v609
          %v641 = vadd.f32 %v640, %v610
          %v642 = vadd.f32 %v641, %v611
          %v643 = vadd.f32 %v642, %v612
          %v644 = vadd.f32 %v643, %v613
          %v645 = vadd.f32 %v644, %v614
          %v646 = vadd.f32 %v645, %v615
          %v647 = vadd.f32 %v646, %v616
          %v648 = vadd.f32 %v647, %v617
          %v649 = vadd.f32 %v648, %v618
          %v650 = vadd.f32 %v649, %v619
          %v651 = vadd.f32 %v650, %v620
          %v652 = vadd.f32 %v651, %v621
          %v653 = vadd.f32 %v652, %v622
          %v654 = vadd.f32 %v653, %v623
          %v655 = vadd.f32 %v654, %v624
          %v656 = vadd.f32 %v655, %v625
          %v657 = vrot.slane %v656, 4
          %v658 = vadd.f32 %v656, %v657
          %v659 = vrot.slane %v658, 2
          %v660 = vadd.f32 %v658, %v659
          %v661 = vrot.slane %v660, 1
          %v662 = vadd.f32 %v660, %v661
          %v663 = vadd.f32 %v593, %v662
          %664 = vst [vmem:[#allocation3] sm:$0x1] %v663
        $region44: #{tpu_custom_call.1} parent=35 // pred_fallthru
          _
        %p665 = scmp.eq.s32.totalorder %s22, 1
        %p666 = pnand %p665, %p543
        %p667 = pneg %p666
        // Predicated region
        $region45: #{tpu_custom_call.1} parent=35 // pred_check
          _
        $region46: #{tpu_custom_call.1} parent=35 // pred_check_branch
          %669 = sbr.rel (%p666) target = $region48
        $region47: #{tpu_custom_call.1} parent=35 // pred_region
          %v670 = vld [vmem:[#allocation2] sm:$0x1]
          %v671 = vmul.f32 %v670, 0.001953125
          %v672 = vld [vmem:[#allocation3] sm:$0x1]
          %v673 = vmul.f32 %v672, 0.001953125
          %v674 = vmul.f32 %v671, %v671
          %v675 = vsub.f32 %v673, %v674
          %v676 = vld [vmem:[%s2] sm:$0x1]
          %v677 = vadd.f32 %v675, 1e-05
          %v678 = vrsqrt.pop %v677
          %v679 = vmul.f32 %v676, %v678
          %680 = vst [vmem:[#allocation4] sm:$0x1] %v679
          %v681 = vld [vmem:[%s3] sm:$0x1]
          %v682 = vmul.f32 %v671, %v679
          %v683 = vsub.f32 %v681, %v682
          %684 = vst [vmem:[#allocation5] sm:$0x1] %v683
        $region48: #{tpu_custom_call.1} parent=35 // pred_fallthru
          _
        // Predicated region
        $region49: #{tpu_custom_call.1} parent=35 // pred_check
          %p685 = pneg %p665
        $region50: #{tpu_custom_call.1} parent=35 // pred_check_branch
          %687 = sbr.rel (%p685) target = $region52
        $region51: #{tpu_custom_call.1} parent=35 // pred_region
          %v688 = vld [vmem:[#allocation4] sm:$0x1]
          %v690 = vlaneseq
          %v691 = vshrl.u32 %v690, 7
          %v692 = vsub.s32 0, %v691
          %v693 = vrot.slane %v688, %v692
          %v695 = vmul.f32 %v416, %v693
          %v696 = vmul.f32 %v419, %v693
          %v697 = vmul.f32 %v424, %v693
          %v698 = vmul.f32 %v427, %v693
          %v699 = vmul.f32 %v432, %v693
          %v700 = vmul.f32 %v435, %v693
          %v701 = vmul.f32 %v440, %v693
          %v702 = vmul.f32 %v443, %v693
          %v703 = vmul.f32 %v448, %v693
          %v704 = vmul.f32 %v451, %v693
          %v705 = vmul.f32 %v456, %v693
          %v706 = vmul.f32 %v459, %v693
          %v707 = vmul.f32 %v464, %v693
          %v708 = vmul.f32 %v467, %v693
          %v709 = vmul.f32 %v472, %v693
          %v710 = vmul.f32 %v475, %v693
          %v711 = vmul.f32 %v480, %v693
          %v712 = vmul.f32 %v483, %v693
          %v713 = vmul.f32 %v488, %v693
          %v714 = vmul.f32 %v491, %v693
          %v715 = vmul.f32 %v496, %v693
          %v716 = vmul.f32 %v499, %v693
          %v717 = vmul.f32 %v504, %v693
          %v718 = vmul.f32 %v507, %v693
          %v719 = vmul.f32 %v512, %v693
          %v720 = vmul.f32 %v515, %v693
          %v721 = vmul.f32 %v520, %v693
          %v722 = vmul.f32 %v523, %v693
          %v723 = vmul.f32 %v528, %v693
          %v724 = vmul.f32 %v531, %v693
          %v725 = vmul.f32 %v536, %v693
          %v726 = vmul.f32 %v539, %v693
          %v727 = vld [vmem:[#allocation5] sm:$0x1]
          %v729 = vlaneseq
          %v730 = vshrl.u32 %v729, 7
          %v731 = vsub.s32 0, %v730
          %v732 = vrot.slane %v727, %v731
          %v734 = vadd.f32 %v695, %v732
          %v735 = vadd.f32 %v696, %v732
          %v736 = vadd.f32 %v697, %v732
          %v737 = vadd.f32 %v698, %v732
          %v738 = vadd.f32 %v699, %v732
          %v739 = vadd.f32 %v700, %v732
          %v740 = vadd.f32 %v701, %v732
          %v741 = vadd.f32 %v702, %v732
          %v742 = vadd.f32 %v703, %v732
          %v743 = vadd.f32 %v704, %v732
          %v744 = vadd.f32 %v705, %v732
          %v745 = vadd.f32 %v706, %v732
          %v746 = vadd.f32 %v707, %v732
          %v747 = vadd.f32 %v708, %v732
          %v748 = vadd.f32 %v709, %v732
          %v749 = vadd.f32 %v710, %v732
          %v750 = vadd.f32 %v711, %v732
          %v751 = vadd.f32 %v712, %v732
          %v752 = vadd.f32 %v713, %v732
          %v753 = vadd.f32 %v714, %v732
          %v754 = vadd.f32 %v715, %v732
          %v755 = vadd.f32 %v716, %v732
          %v756 = vadd.f32 %v717, %v732
          %v757 = vadd.f32 %v718, %v732
          %v758 = vadd.f32 %v719, %v732
          %v759 = vadd.f32 %v720, %v732
          %v760 = vadd.f32 %v721, %v732
          %v761 = vadd.f32 %v722, %v732
          %v762 = vadd.f32 %v723, %v732
          %v763 = vadd.f32 %v724, %v732
          %v764 = vadd.f32 %v725, %v732
          %v765 = vadd.f32 %v726, %v732
          %v766 = vmax.f32 %v734, 0.0
          %v767 = vmax.f32 %v735, 0.0
          %v768 = vmax.f32 %v736, 0.0
          %v769 = vmax.f32 %v737, 0.0
          %v770 = vmax.f32 %v738, 0.0
          %v771 = vmax.f32 %v739, 0.0
          %v772 = vmax.f32 %v740, 0.0
          %v773 = vmax.f32 %v741, 0.0
          %v774 = vmax.f32 %v742, 0.0
          %v775 = vmax.f32 %v743, 0.0
          %v776 = vmax.f32 %v744, 0.0
          %v777 = vmax.f32 %v745, 0.0
          %v778 = vmax.f32 %v746, 0.0
          %v779 = vmax.f32 %v747, 0.0
          %v780 = vmax.f32 %v748, 0.0
          %v781 = vmax.f32 %v749, 0.0
          %v782 = vmax.f32 %v750, 0.0
          %v783 = vmax.f32 %v751, 0.0
          %v784 = vmax.f32 %v752, 0.0
          %v785 = vmax.f32 %v753, 0.0
          %v786 = vmax.f32 %v754, 0.0
          %v787 = vmax.f32 %v755, 0.0
          %v788 = vmax.f32 %v756, 0.0
          %v789 = vmax.f32 %v757, 0.0
          %v790 = vmax.f32 %v758, 0.0
          %v791 = vmax.f32 %v759, 0.0
          %v792 = vmax.f32 %v760, 0.0
          %v793 = vmax.f32 %v761, 0.0
          %v794 = vmax.f32 %v762, 0.0
          %v795 = vmax.f32 %v763, 0.0
          %v796 = vmax.f32 %v764, 0.0
          %v797 = vmax.f32 %v765, 0.0
          %798 = vst [vmem:[%s205] sm:$0xff] %v766
          %799 = vst [vmem:[%s205 + $0x8] sm:$0xff] %v767
          %800 = vst [vmem:[%s205 + $0x10] sm:$0xff] %v768
          %801 = vst [vmem:[%s205 + $0x18] sm:$0xff] %v769
          %802 = vst [vmem:[%s205 + $0x20] sm:$0xff] %v770
          %803 = vst [vmem:[%s205 + $0x28] sm:$0xff] %v771
          %804 = vst [vmem:[%s205 + $0x30] sm:$0xff] %v772
          %805 = vst [vmem:[%s205 + $0x38] sm:$0xff] %v773
          %806 = vst [vmem:[%s205 + $0x40] sm:$0xff] %v774
          %807 = vst [vmem:[%s205 + $0x48] sm:$0xff] %v775
          %808 = vst [vmem:[%s205 + $0x50] sm:$0xff] %v776
          %809 = vst [vmem:[%s205 + $0x58] sm:$0xff] %v777
          %810 = vst [vmem:[%s205 + $0x60] sm:$0xff] %v778
          %811 = vst [vmem:[%s205 + $0x68] sm:$0xff] %v779
          %812 = vst [vmem:[%s205 + $0x70] sm:$0xff] %v780
          %813 = vst [vmem:[%s205 + $0x78] sm:$0xff] %v781
          %814 = vst [vmem:[%s205 + $0x80] sm:$0xff] %v782
          %815 = vst [vmem:[%s205 + $0x88] sm:$0xff] %v783
          %816 = vst [vmem:[%s205 + $0x90] sm:$0xff] %v784
          %817 = vst [vmem:[%s205 + $0x98] sm:$0xff] %v785
          %818 = vst [vmem:[%s205 + $0xa0] sm:$0xff] %v786
          %819 = vst [vmem:[%s205 + $0xa8] sm:$0xff] %v787
          %820 = vst [vmem:[%s205 + $0xb0] sm:$0xff] %v788
          %821 = vst [vmem:[%s205 + $0xb8] sm:$0xff] %v789
          %822 = vst [vmem:[%s205 + $0xc0] sm:$0xff] %v790
          %823 = vst [vmem:[%s205 + $0xc8] sm:$0xff] %v791
          %824 = vst [vmem:[%s205 + $0xd0] sm:$0xff] %v792
          %825 = vst [vmem:[%s205 + $0xd8] sm:$0xff] %v793
          %826 = vst [vmem:[%s205 + $0xe0] sm:$0xff] %v794
          %827 = vst [vmem:[%s205 + $0xe8] sm:$0xff] %v795
          %828 = vst [vmem:[%s205 + $0xf0] sm:$0xff] %v796
          %829 = vst [vmem:[%s205 + $0xf8] sm:$0xff] %v797
        $region52: #{tpu_custom_call.1} parent=35 // pred_fallthru
          _
        %s830 = sand.u32 %s129, 1
        %s831 = scalar_lea.sflag [#allocation7], %s830
        %s832 = sand.u32 %s129, 1
        %s833 = smul.addr %s832, 256
        %s834 = scalar_lea.vmem [#allocation6], %s833
        // Predicated region
        $region53: #{tpu_custom_call.1} parent=35 // pred_check
          %p835 = pneg %p139
        $region54: #{tpu_custom_call.1} parent=35 // pred_check_branch
          %837 = sbr.rel (%p835) target = $region56
        $region55: #{tpu_custom_call.1} parent=35 // pred_region
          %s838 = smul.u32 %s22, %s23
          %s839 = smul.u32 32, %s838
          %s841 = ssub.s32 4096, 4096
          %842 = vsyncadd %s831, %s841
          %s843 = smul.addr %s839, 128
          %s844 = scalar_lea.hbm %s4, %s843
          %s845 = sshll.u32 %s834, 4
          %s846 = int_to_ptr.vmem [resolvable:$true] %s845
          %851 = dma.vmem_to_hbm [thread:$0]  %s846, 4096, %s844, %s831, 128, 128, 8
        $region56: #{tpu_custom_call.1} parent=35 // pred_fallthru
          _
      $region36: #{tpu_custom_call.1} parent=5 // pred_fallthru
        _
      %p852 = scmp.le.s32.totalorder 2, %s13
      // Predicated region
      $region57: #{tpu_custom_call.1} parent=5 // pred_check
        %p853 = pneg %p852
      $region58: #{tpu_custom_call.1} parent=5 // pred_check_branch
        %855 = sbr.rel (%p853) target = $region60
      $region59: #{tpu_custom_call.1} parent=5 // pred_region
        %s856 = ssub.s32 %s13, 2
        // Predicated region
        $region61: #{tpu_custom_call.1} parent=59 // pred_check
          %p857 = pneg %p145
        $region62: #{tpu_custom_call.1} parent=59 // pred_check_branch
          %859 = sbr.rel (%p857) target = $region64
        $region63: #{tpu_custom_call.1} parent=59 // pred_region
          %s860 = sand.u32 %s130, 1
          %s861 = scalar_lea.sflag [#allocation7], %s860
          %s862 = sand.u32 %s130, 1
          %s863 = smul.addr %s862, 256
          %s864 = scalar_lea.vmem [#allocation6], %s863
          %865 = dma.done %s861, 4096
        $region64: #{tpu_custom_call.1} parent=59 // pred_fallthru
          _
      $region60: #{tpu_custom_call.1} parent=5 // pred_fallthru
        _
    $region6: #{tpu_custom_call.1} parent=1 // loop_footer
      %s17 = sadd.s32 1, %s13
    $region7: #{tpu_custom_call.1} parent=1 // loop_footer_branch
      %12 = sbr.rel target = $region3
    $region8: #{tpu_custom_call.1} parent=1 // loop_exit
      _
    %866 = vsyncpa [#allocation7], 1
    %s867 = scalar_lea.sflag [#allocation7], 1
    %868 = vsyncpa %s867, 1

</llo_original>
